<compile_context>
chip_gen: v7x
topology: tpu7x:2x2x1
jax: 0.10.0
libtpu: 0.0.40
codegen_flags: <defaults>
</compile_context>

<pallas_src>
import functools

import jax
import jax.numpy as jnp
from jax.experimental import pallas as pl
from jax.experimental.pallas import tpu as pltpu


# ----------------------------------------------------------------------------
# Small integer helpers
# ----------------------------------------------------------------------------
def _cdiv(a, b):
    return -(-a // b)


def _round_up(x, m):
    return _cdiv(x, m) * m


def _round_down(x, m):
    return (x // m) * m


def _vmem_capacity_bytes():
    """Per-TensorCore VMEM capacity; conservative fallback if the query fails."""
    try:
        cap = int(getattr(pltpu.get_tpu_info(), "vmem_capacity_bytes", 0))
        if cap > 0:
            return cap
    except Exception:
        pass
    return 64 << 20  # v7x-class (smallest VMEM) as the safe default


def _vmem_budget(cap):
    """Usable VMEM with headroom: ~52 MiB on v7x (64 MiB), ~102 MiB on v5e/v6e."""
    return cap - max(cap // 5, 12 << 20)


# ----------------------------------------------------------------------------
# Tile picking (generation aware)
# ----------------------------------------------------------------------------
def _pick_tiles(nmol, N, itemsize):
    """Pick (tb, C, nchunk): tb molecules per block, C flat-row chunk length."""
    flat = N * N
    cap = _vmem_capacity_bytes()
    budget = _vmem_budget(cap)
    # Per-input block target: ~3 MiB/input (12 MiB/step) on 128-MiB parts,
    # ~1.75 MiB/input (7 MiB/step) on v7x (64 MiB/TC).
    target = (3 << 20) if cap >= (96 << 20) else (7 << 20) // 4
    # Honest footprint: 4 inputs x 2 pipeline buffers + ~3 block-sized temporaries.
    blk_bytes = max(8 * 128 * itemsize, min(target, budget // 11))

    row_bytes = _round_up(flat, 128) * itemsize      # layout-padded flat row bytes
    group = min(8, nmol)                             # sublane group

    if row_bytes * group <= blk_bytes:
        # Whole molecules per block.
        C, nchunk = flat, 1
        tb = max(group, _round_down(blk_bytes // row_bytes, 8))
    else:
        # A single molecule exceeds the block budget: chunk the flattened row
        # into lane-dense pieces (multiples of 128 lanes).
        tb = group
        C = max(128, _round_down(blk_bytes // (tb * itemsize), 128))
        if C >= flat:
            C, nchunk = flat, 1
        else:
            nchunk = _cdiv(flat, C)

    # Batch-axis blocking: balance blocks; prefer >= 4 total grid steps when
    # there is enough work (pipeline overlap + feeds both v7x TensorCores).
    # The last block may be ragged -- no host-side padding, Pallas clips it.
    nbatch = _cdiv(nmol, tb)
    if nbatch * nchunk < 4:
        nbatch = max(nbatch, min(_cdiv(4, nchunk), _cdiv(nmol, 8)), 1)
    tb = _cdiv(nmol, nbatch)
    if tb < nmol:
        tb = max(8, _round_up(tb, 8))                # block sublane-dim rule
    return tb, C, nchunk


# ----------------------------------------------------------------------------
# Kernel
# ----------------------------------------------------------------------------
def _elec_energy_xl_kernel(d_ref, p_ref, f_ref, h_ref, o_ref, *,
                           chunk_len, flat_len, ragged):
    """One (TB, C) block: per-molecule partial sums of F*(D-0.5P) + h*(0.5P)."""
    j = pl.program_id(1)                             # flat-row chunk ("arbitrary")

    @pl.when(j == 0)
    def _():
        o_ref[...] = jnp.zeros_like(o_ref)

    D = d_ref[...]
    P = p_ref[...]
    F = f_ref[...]
    H = h_ref[...]

    hp = 0.5 * P
    contrib = (F * (D - hp) + H * hp).astype(jnp.float32)

    if ragged:
        # Last chunk extends past N*N: select (never multiply) the valid
        # positions so stale tail data cannot pollute real molecules' sums.
        pos = chunk_len * j + jax.lax.broadcasted_iota(jnp.int32, contrib.shape, 1)
        contrib = jnp.where(pos < flat_len, contrib, 0.0)

    # Per-molecule partial sum, accumulated in the resident (TB, 1) output block.
    o_ref[...] += jnp.sum(contrib, axis=-1, keepdims=True)


# ----------------------------------------------------------------------------
# Wrapper
# ----------------------------------------------------------------------------
def elec_energy_xl(D, P, F, Hcore, *, _force_tiles=None):
    """Pallas version of elec_energy_xl.  Inputs: float32 [nmol, N, N]."""
    nmol, N, _ = D.shape
    flat = N * N
    itemsize = D.dtype.itemsize

    # Symmetrize the upper triangle of Hcore upstream (exact reference math:
    # h = triu(Hc) + triu(Hc,1)^T).  This keeps the kernel purely elementwise
    # over lane-dense flattened rows (no in-kernel transpose / triangle masks);
    # in the full EnergyXL pipeline this folds into the Hcore assembly step.
    h = jnp.triu(Hcore) + jnp.transpose(jnp.triu(Hcore, 1), (0, 2, 1))

    # Free reshapes of contiguous arrays -> lane-dense (nmol, N*N) rows.
    Df = D.reshape(nmol, flat)
    Pf = P.reshape(nmol, flat)
    Ff = F.reshape(nmol, flat)
    hf = h.reshape(nmol, flat)

    if _force_tiles is None:
        tb, C, nchunk = _pick_tiles(nmol, N, itemsize)
    else:
        tb, C, nchunk = _force_tiles                 # testing hook
    nbatch = _cdiv(nmol, tb)
    ragged_chunk = (nchunk * C) != flat

    kernel = functools.partial(_elec_energy_xl_kernel,
                               chunk_len=C, flat_len=flat, ragged=ragged_chunk)

    in_spec = pl.BlockSpec((tb, C), lambda i, j: (i, j))
    out_spec = pl.BlockSpec((tb, 1), lambda i, j: (i, 0))

    # Honest VMEM need: 4 inputs x 2 pipeline buffers (layout-padded) +
    # ~3 f32 block-sized temporaries + output buffers + slack.
    cap = _vmem_capacity_bytes()
    blk_pad = _round_up(tb, 8) * _round_up(C, 128)
    vmem_need = (8 * blk_pad * itemsize
                 + 3 * blk_pad * 4
                 + 2 * _round_up(tb, 8) * 128 * 4
                 + (1 << 20))
    vmem_limit = int(min(_vmem_budget(cap), max(vmem_need, 32 << 20)))

    out = pl.pallas_call(
        kernel,
        out_shape=jax.ShapeDtypeStruct((nmol, 1), jnp.float32),
        grid_spec=pltpu.PrefetchScalarGridSpec(
            num_scalar_prefetch=0,
            grid=(nbatch, nchunk),
            in_specs=[in_spec, in_spec, in_spec, in_spec],
            out_specs=out_spec,
        ),
        compiler_params=pltpu.CompilerParams(
            dimension_semantics=("parallel", "arbitrary"),
            vmem_limit_bytes=vmem_limit,
        ),
        cost_estimate=pl.CostEstimate(
            flops=6 * nmol * flat,
            transcendentals=0,
            bytes_accessed=4 * nmol * flat * itemsize + nmol * 4,
        ),
    )(Df, Pf, Ff, hf)

    return out.reshape(nmol)


def elec_energy_xl_ref(D, P, F, Hcore):
    """Pure-JAX reference (mirrors the PyTorch code exactly)."""
    h = jnp.triu(Hcore) + jnp.transpose(jnp.triu(Hcore, 1), (0, 2, 1))
    return jnp.sum(D * F - 0.5 * (F - h) * P, axis=(1, 2))


class EnergyXL:
    """Minimal JAX analogue of seqm EnergyXL for the Pallas-covered path.

    The module's __init__ holds no learnable tensors (only method strings and
    parameter-packing helpers), so there are no weights to initialize here.
    Only the `elec_energy_xl` energy evaluation runs on-device as a kernel.
    TODO(synk): Parser/Pack_Parameters, hcore+STO integrals, fock, SP2 /
    sym_eig_trunc and pair_nuclear_energy are not translatable (source not
    provided in this module).
    """

    def __init__(self, seqm_parameters):
        self.method = seqm_parameters.get('method', 'PM3')
        self.seqm_parameters = seqm_parameters
        self.Hf_flag = seqm_parameters.get('Hf_flag', True)

    def __call__(self, D, P, F, Hcore):
        # D: density matrix, P: dynamics field tensor, F: Fock, Hcore: core H.
        return elec_energy_xl(D, P, F, Hcore)


if __name__ == "__main__":
    # Forward-consistent small shapes: nmol=2 molecules, molsize=8 atoms
    # -> N = 4*molsize = 32 orbital basis functions per molecule.
    nmol, molsize = 2, 8
    N = 4 * molsize

    key = jax.random.PRNGKey(0)
    keys = jax.random.split(key, 12)

    def sym(a):  # physical density/Fock matrices are symmetric
        return 0.5 * (a + jnp.transpose(a, (0, 2, 1)))

    D = sym(jax.random.normal(keys[0], (nmol, N, N), dtype=jnp.float32))
    P = sym(jax.random.normal(keys[1], (nmol, N, N), dtype=jnp.float32))
    F = sym(jax.random.normal(keys[2], (nmol, N, N), dtype=jnp.float32))
    Hcore = jax.random.normal(keys[3], (nmol, N, N), dtype=jnp.float32)

    model = EnergyXL({'method': 'PM3', 'sp2': [False]})
    Eelec = jax.block_until_ready(model(D, P, F, Hcore))
    Eref = elec_energy_xl_ref(D, P, F, Hcore)
    assert Eelec.shape == (nmol,)
    assert jnp.allclose(Eelec, Eref, rtol=1e-4, atol=1e-3), (Eelec, Eref)

    # Larger batch: multi-block grid with a ragged (un-padded) batch tail.
    nmol2 = 260
    D2 = sym(jax.random.normal(keys[4], (nmol2, N, N), dtype=jnp.float32))
    P2 = sym(jax.random.normal(keys[5], (nmol2, N, N), dtype=jnp.float32))
    F2 = sym(jax.random.normal(keys[6], (nmol2, N, N), dtype=jnp.float32))
    H2 = jax.random.normal(keys[7], (nmol2, N, N), dtype=jnp.float32)
    E2 = jax.block_until_ready(elec_energy_xl(D2, P2, F2, H2))
    assert E2.shape == (nmol2,)
    assert jnp.allclose(E2, elec_energy_xl_ref(D2, P2, F2, H2),
                        rtol=1e-4, atol=1e-3)

    # Force the chunked-row path (ragged chunk tail + ragged batch tail), with
    # non-symmetric inputs, to exercise the accumulator path on any generation.
    nmol3 = 20
    D3 = jax.random.normal(keys[8], (nmol3, N, N), dtype=jnp.float32)
    P3 = jax.random.normal(keys[9], (nmol3, N, N), dtype=jnp.float32)
    F3 = jax.random.normal(keys[10], (nmol3, N, N), dtype=jnp.float32)
    H3 = jax.random.normal(keys[11], (nmol3, N, N), dtype=jnp.float32)
    E3 = jax.block_until_ready(
        elec_energy_xl(D3, P3, F3, H3, _force_tiles=(8, 384, 3)))
    assert E3.shape == (nmol3,)
    assert jnp.allclose(E3, elec_energy_xl_ref(D3, P3, F3, H3),
                        rtol=1e-4, atol=1e-3)

    print("KERNEL_OK")
</pallas_src>

<mosaic_0001>
module attributes {stable_mosaic.version = 11 : i64} {
  func.func @_elec_energy_xl_kernel(%arg0: i32, %arg1: i32, %arg2: memref<2x1024xf32, #tpu.memory_space<vmem>>, %arg3: memref<2x1024xf32, #tpu.memory_space<vmem>>, %arg4: memref<2x1024xf32, #tpu.memory_space<vmem>>, %arg5: memref<2x1024xf32, #tpu.memory_space<vmem>>, %arg6: memref<2x1xf32, #tpu.memory_space<vmem>>) attributes {dimension_semantics = [#tpu.dimension_semantics<parallel>, #tpu.dimension_semantics<arbitrary>], iteration_bounds = array<i64: 1, 1>, scalar_prefetch = 0 : i64, scratch_operands = 0 : i64, tpu.core_type = #tpu.core_type<tc>, window_params = [{transform_indices = @transform_0, window_bounds = array<i64: 2, 1024>}, {transform_indices = @transform_1, window_bounds = array<i64: 2, 1024>}, {transform_indices = @transform_2, window_bounds = array<i64: 2, 1024>}, {transform_indices = @transform_3, window_bounds = array<i64: 2, 1024>}, {transform_indices = @transform_4, window_bounds = array<i64: 2, 1>}]} {
    %c0_i32 = arith.constant 0 : i32
    %0 = arith.cmpi eq, %arg1, %c0_i32 : i32
    %1 = arith.extui %0 : i1 to i32
    %c0_i32_0 = arith.constant 0 : i32
    %2 = arith.cmpi ne, %1, %c0_i32_0 : i32
    scf.if %2 {
      %cst_13 = arith.constant 0.000000e+00 : f32
      %18 = vector.broadcast %cst_13 : f32 to vector<2x1xf32>
      %c0_14 = arith.constant 0 : index
      %c0_15 = arith.constant 0 : index
      %19 = vector.load %arg6[%c0_14, %c0_15] : memref<2x1xf32, #tpu.memory_space<vmem>>, vector<2x1xf32>
      tpu.vector_store %arg6[%c0_14, %c0_15], %18 {strides = array<i32>} : memref<2x1xf32, #tpu.memory_space<vmem>>, vector<2x1xf32>,
    } else {
    }
    %c0 = arith.constant 0 : index
    %c0_1 = arith.constant 0 : index
    %3 = vector.load %arg2[%c0, %c0_1] : memref<2x1024xf32, #tpu.memory_space<vmem>>, vector<2x1024xf32>
    %c0_2 = arith.constant 0 : index
    %c0_3 = arith.constant 0 : index
    %4 = vector.load %arg3[%c0_2, %c0_3] : memref<2x1024xf32, #tpu.memory_space<vmem>>, vector<2x1024xf32>
    %c0_4 = arith.constant 0 : index
    %c0_5 = arith.constant 0 : index
    %5 = vector.load %arg4[%c0_4, %c0_5] : memref<2x1024xf32, #tpu.memory_space<vmem>>, vector<2x1024xf32>
    %c0_6 = arith.constant 0 : index
    %c0_7 = arith.constant 0 : index
    %6 = vector.load %arg5[%c0_6, %c0_7] : memref<2x1024xf32, #tpu.memory_space<vmem>>, vector<2x1024xf32>
    %cst = arith.constant 5.000000e-01 : f32
    %7 = vector.broadcast %cst : f32 to vector<2x1024xf32>
    %8 = arith.mulf %7, %4 : vector<2x1024xf32>
    %9 = arith.subf %3, %8 : vector<2x1024xf32>
    %10 = arith.mulf %5, %9 : vector<2x1024xf32>
    %11 = arith.mulf %6, %8 : vector<2x1024xf32>
    %12 = arith.addf %10, %11 : vector<2x1024xf32>
    %c0_8 = arith.constant 0 : index
    %c0_9 = arith.constant 0 : index
    %13 = vector.load %arg6[%c0_8, %c0_9] : memref<2x1xf32, #tpu.memory_space<vmem>>, vector<2x1xf32>
    %cst_10 = arith.constant dense<0.000000e+00> : vector<2xf32>
    %14 = vector.multi_reduction <add>, %12, %cst_10 [1] : vector<2x1024xf32> to vector<2xf32>
    %15 = vector.shape_cast %14 : vector<2xf32> to vector<2x1xf32>
    %16 = arith.addf %13, %15 : vector<2x1xf32>
    %c0_11 = arith.constant 0 : index
    %c0_12 = arith.constant 0 : index
    %17 = vector.load %arg6[%c0_11, %c0_12] : memref<2x1xf32, #tpu.memory_space<vmem>>, vector<2x1xf32>
    tpu.vector_store %arg6[%c0_11, %c0_12], %16 {strides = array<i32>} : memref<2x1xf32, #tpu.memory_space<vmem>>, vector<2x1xf32>,
    return
  }
  func.func @transform_0(%arg0: i32, %arg1: i32) -> (i32, i32) {
    %c0_i32 = arith.constant 0 : i32
    return %arg0, %arg1 : i32, i32
  }
  func.func @transform_1(%arg0: i32, %arg1: i32) -> (i32, i32) {
    %c0_i32 = arith.constant 0 : i32
    return %arg0, %arg1 : i32, i32
  }
  func.func @transform_2(%arg0: i32, %arg1: i32) -> (i32, i32) {
    %c0_i32 = arith.constant 0 : i32
    return %arg0, %arg1 : i32, i32
  }
  func.func @transform_3(%arg0: i32, %arg1: i32) -> (i32, i32) {
    %c0_i32 = arith.constant 0 : i32
    return %arg0, %arg1 : i32, i32
  }
  func.func @transform_4(%arg0: i32, %arg1: i32) -> (i32, i32) {
    %c0_i32 = arith.constant 0 : i32
    %c0_i32_0 = arith.constant 0 : i32
    return %arg0, %c0_i32 : i32, i32
  }
}

</mosaic_0001>

<llo_original>
// kernel: tpu_custom_call.1
$region0: #{tpu_custom_call.1}
  #allocation0 [shape = 'u32[]', space=smem, size = 0x4, offset = 0x4, fixed_abs, tag = 'smem constant byte address 0x4 - core index']
  #allocation1 [shape = 'u32[144,128]{1,0:T(1,128)}', space=vmem, size = 0x12000, scoped, tag = 'internal scratch']
  %s0 = inlined_call_operand.hbm [shape: f32[2,1024], index: 0, kind: input, shape index: {}]
  %s1 = inlined_call_operand.hbm [shape: f32[2,1024], index: 1, kind: input, shape index: {}]
  %s2 = inlined_call_operand.hbm [shape: f32[2,1024], index: 2, kind: input, shape index: {}]
  %s3 = inlined_call_operand.hbm [shape: f32[2,1024], index: 3, kind: input, shape index: {}]
  %s4 = inlined_call_operand.vmem [shape: f32[2,1], index: 4, kind: output, shape index: {}]
  %s5 = sld [smem:[#allocation0]]
  $region46: #{tpu_custom_call.1} parent=0
    _
  %s7 = ssub.s32 1, %s5
  %s8 = scalar_select 0, %s7, %s5
  $region1: #{tpu_custom_call.1} parent=0
    #allocation2 [shape = 'u8[8192]{0}', space=vmem, size = 0x2000, scoped, tag = 'input window, operand 0, single buffered']
    #allocation3 [shape = 's32[1]{0}', space=sflag, size = 0x4, scoped, tag = 'scoped memory for tpu_custom_call.1']
    #allocation4 [shape = 'u8[8192]{0}', space=vmem, size = 0x2000, scoped, tag = 'input window, operand 1, single buffered']
    #allocation5 [shape = 's32[1]{0}', space=sflag, size = 0x4, scoped, tag = 'scoped memory for tpu_custom_call.1']
    #allocation6 [shape = 'u8[8192]{0}', space=vmem, size = 0x2000, scoped, tag = 'input window, operand 2, single buffered']
    #allocation7 [shape = 'u8[8192]{0}', space=vmem, size = 0x2000, scoped, tag = 'input window, operand 3, single buffered']
    #allocation8 [shape = 's32[1]{0}', space=sflag, size = 0x4, scoped, tag = 'scoped memory for tpu_custom_call.1']
    %9 = vsyncpa [#allocation3], 0
    %10 = vsyncpa [#allocation5], 0
    %11 = vsyncpa [#allocation8], 0
    // Predicated region
    $region2: #{tpu_custom_call.1} parent=1 // pred_check
      _
    $region3: #{tpu_custom_call.1} parent=1 // pred_check_branch
      %13 = sbr.rel (0) target = $region5
    $region4: #{tpu_custom_call.1} parent=1 // pred_region
      %s15 = ssub.s32 256, 256
      %16 = vsyncadd [#allocation3], %s15
      %s18 = sshll.u32 [#allocation2], 4
      %s19 = int_to_ptr.vmem [resolvable:$true] %s18
      %21 = dma.hbm_to_vmem [thread:$0]  %s0, 256, %s19, [#allocation3]
    $region5: #{tpu_custom_call.1} parent=1 // pred_fallthru
      _
    // Predicated region
    $region6: #{tpu_custom_call.1} parent=1 // pred_check
      _
    $region7: #{tpu_custom_call.1} parent=1 // pred_check_branch
      %23 = sbr.rel (0) target = $region9
    $region8: #{tpu_custom_call.1} parent=1 // pred_region
      %s25 = ssub.s32 256, 256
      %26 = vsyncadd [#allocation5], %s25
      %s28 = sshll.u32 [#allocation4], 4
      %s29 = int_to_ptr.vmem [resolvable:$true] %s28
      %31 = dma.hbm_to_vmem [thread:$0]  %s1, 256, %s29, [#allocation5]
    $region9: #{tpu_custom_call.1} parent=1 // pred_fallthru
      _
    // Predicated region
    $region10: #{tpu_custom_call.1} parent=1 // pred_check
      _
    $region11: #{tpu_custom_call.1} parent=1 // pred_check_branch
      %33 = sbr.rel (0) target = $region13
    $region12: #{tpu_custom_call.1} parent=1 // pred_region
      %s35 = ssub.s32 256, 256
      %36 = vsyncadd [#allocation5], %s35
      %s38 = sshll.u32 [#allocation6], 4
      %s39 = int_to_ptr.vmem [resolvable:$true] %s38
      %41 = dma.hbm_to_vmem [thread:$0]  %s2, 256, %s39, [#allocation5]
    $region13: #{tpu_custom_call.1} parent=1 // pred_fallthru
      _
    // Predicated region
    $region14: #{tpu_custom_call.1} parent=1 // pred_check
      _
    $region15: #{tpu_custom_call.1} parent=1 // pred_check_branch
      %43 = sbr.rel (0) target = $region17
    $region16: #{tpu_custom_call.1} parent=1 // pred_region
      %s45 = ssub.s32 256, 256
      %46 = vsyncadd [#allocation8], %s45
      %s48 = sshll.u32 [#allocation7], 4
      %s49 = int_to_ptr.vmem [resolvable:$true] %s48
      %51 = dma.hbm_to_vmem [thread:$0]  %s3, 256, %s49, [#allocation8]
    $region17: #{tpu_custom_call.1} parent=1 // pred_fallthru
      _
    // Predicated region
    $region18: #{tpu_custom_call.1} parent=1 // pred_check
      _
    $region19: #{tpu_custom_call.1} parent=1 // pred_check_branch
      %53 = sbr.rel (0) target = $region21
    $region20: #{tpu_custom_call.1} parent=1 // pred_region
      %54 = dma.done [#allocation3], 256
    $region21: #{tpu_custom_call.1} parent=1 // pred_fallthru
      _
    // Predicated region
    $region22: #{tpu_custom_call.1} parent=1 // pred_check
      _
    $region23: #{tpu_custom_call.1} parent=1 // pred_check_branch
      %56 = sbr.rel (0) target = $region25
    $region24: #{tpu_custom_call.1} parent=1 // pred_region
      %57 = dma.done [#allocation5], 256
    $region25: #{tpu_custom_call.1} parent=1 // pred_fallthru
      _
    // Predicated region
    $region26: #{tpu_custom_call.1} parent=1 // pred_check
      _
    $region27: #{tpu_custom_call.1} parent=1 // pred_check_branch
      %59 = sbr.rel (0) target = $region29
    $region28: #{tpu_custom_call.1} parent=1 // pred_region
      %60 = dma.done [#allocation5], 256
    $region29: #{tpu_custom_call.1} parent=1 // pred_fallthru
      _
    // Predicated region
    $region30: #{tpu_custom_call.1} parent=1 // pred_check
      _
    $region31: #{tpu_custom_call.1} parent=1 // pred_check_branch
      %62 = sbr.rel (0) target = $region33
    $region32: #{tpu_custom_call.1} parent=1 // pred_region
      %63 = dma.done [#allocation8], 256
    $region33: #{tpu_custom_call.1} parent=1 // pred_fallthru
      _
    %p64 = scmp.eq.s32.totalorder 0, 0
    // Predicated region
    $region34: #{tpu_custom_call.1} parent=1 // pred_check
      %p65 = pneg %p64
    $region35: #{tpu_custom_call.1} parent=1 // pred_check_branch
      %67 = sbr.rel (%p65) target = $region37
    $region36: #{tpu_custom_call.1} parent=1 // pred_region
      %vm68 = vcmask 1024
      %69 = vst.msk [vmem:[%s4] sm:$0x3] %vm68, 0.0
    $region37: #{tpu_custom_call.1} parent=1 // pred_fallthru
      _
    %v70 = vld [vmem:[#allocation2] sm:$0xff]
    %v71 = vld [vmem:[#allocation2 + $0x8] sm:$0xff]
    %v72 = vld [vmem:[#allocation4] sm:$0xff]
    %v73 = vld [vmem:[#allocation4 + $0x8] sm:$0xff]
    %v74 = vld [vmem:[#allocation6] sm:$0xff]
    %v75 = vld [vmem:[#allocation6 + $0x8] sm:$0xff]
    %v76 = vld [vmem:[#allocation7] sm:$0xff]
    %v77 = vld [vmem:[#allocation7 + $0x8] sm:$0xff]
    %v78 = vmul.f32 %v72, 0.5
    %v79 = vmul.f32 %v73, 0.5
    %v80 = vsub.f32 %v70, %v78
    %v81 = vsub.f32 %v71, %v79
    %v82 = vmul.f32 %v74, %v80
    %v83 = vmul.f32 %v75, %v81
    %v84 = vmul.f32 %v76, %v78
    %v85 = vmul.f32 %v77, %v79
    %v86 = vadd.f32 %v82, %v84
    %v87 = vadd.f32 %v83, %v85
    %v88 = vld [vmem:[%s4] sm:$0x3]
    %v91 = vcombine.high %v86, %v86
    %v93 = vunpack.c.l.s4 1983009808
    %v94 = vunpack.c.0.s8 %v93
    %v95 = vlaneseq
    %v96 = vshrl.u32 %v95, 7
    %v97 = vsub.s32 %v94, %v96
    %v98 = vrot.slane %v86, %v97
    %v100 = vunpack.c.l.s4 1983009808
    %v101 = vunpack.c.0.s8 %v100
    %v102 = vlaneseq
    %v103 = vshrl.u32 %v102, 7
    %v104 = vsub.s32 %v101, %v103
    %v105 = vrot.slane %v91, %v104
    %v106 = vcombine.high %v98, %v98
    %v107 = vcombine.high %v105, %v105
    %v108 = vcombine.high %v87, %v87
    %v110 = vunpack.c.l.s4 1983009808
    %v111 = vunpack.c.0.s8 %v110
    %v112 = vlaneseq
    %v113 = vshrl.u32 %v112, 7
    %v114 = vsub.s32 %v111, %v113
    %v115 = vrot.slane %v87, %v114
    %v117 = vunpack.c.l.s4 1983009808
    %v118 = vunpack.c.0.s8 %v117
    %v119 = vlaneseq
    %v120 = vshrl.u32 %v119, 7
    %v121 = vsub.s32 %v118, %v120
    %v122 = vrot.slane %v108, %v121
    %v123 = vcombine.high %v115, %v115
    %v124 = vcombine.high %v122, %v122
    %vm133 = vcmask 1041408
    %v134 = vsel %vm133, %v98, 0.0
    %v135 = vsel %vm133, %v106, 0.0
    %v136 = vadd.f32 %v134, %v135
    %v137 = vsel %vm133, %v105, 0.0
    %v138 = vadd.f32 %v136, %v137
    %v139 = vsel %vm133, %v107, 0.0
    %v140 = vadd.f32 %v138, %v139
    %v141 = vsel %vm133, %v115, 0.0
    %v142 = vadd.f32 %v140, %v141
    %v143 = vsel %vm133, %v123, 0.0
    %v144 = vadd.f32 %v142, %v143
    %v145 = vsel %vm133, %v122, 0.0
    %v146 = vadd.f32 %v144, %v145
    %v147 = vsel %vm133, %v124, 0.0
    %v148 = vadd.f32 %v146, %v147
    %149 = vadd.xlane.f32.xlu0 %v148
    %v150 = vpop.xlane.xlu0 %149
    %v151 = vadd.f32 %v88, %v150
    %vm152 = vcmask 1024
    %153 = vst.msk [vmem:[%s4] sm:$0x3] %vm152, %v151
    // Predicated region
    $region38: #{tpu_custom_call.1} parent=1 // pred_check
      _
    $region39: #{tpu_custom_call.1} parent=1 // pred_check_branch
      %155 = sbr.rel (0) target = $region41
    $region40: #{tpu_custom_call.1} parent=1 // pred_region
      _
    $region41: #{tpu_custom_call.1} parent=1 // pred_fallthru
      _
    // Predicated region
    $region42: #{tpu_custom_call.1} parent=1 // pred_check
      _
    $region43: #{tpu_custom_call.1} parent=1 // pred_check_branch
      %157 = sbr.rel (0) target = $region45
    $region44: #{tpu_custom_call.1} parent=1 // pred_region
      _
    $region45: #{tpu_custom_call.1} parent=1 // pred_fallthru
      _
    %158 = vsyncpa [#allocation3], 1
    %159 = vsyncpa [#allocation5], 1
    %160 = vsyncpa [#allocation8], 1

</llo_original>
